<compile_context>
chip_gen: v7x
topology: tpu7x:2x2x1
jax: 0.10.0
libtpu: 0.0.40
codegen_flags: <defaults>
</compile_context>

<pallas_src>
import numpy as np
import jax
import jax.numpy as jnp
from jax.experimental import pallas as pl
from jax.experimental.pallas import tpu as pltpu

NUM_TASKS    = 3      # stand-in for len(run_time.ALL_AUXILIARY_TASK_LIST)
MAIN_TASK_ID = 0      # stand-in for task_name_id_map[main_task]
NUM_CLASSES  = 4
HIDDEN       = 32     # "BERT" hidden size stand-in
EMB          = 32
SPECIAL_DIM  = 32
VOCAB        = 50
HEAD_PAD     = 128    # lane-dense width for every kernel output (exactly 128)

OUT_WIDTH    = NUM_TASKS * NUM_CLASSES       # 12 logit lanes
SPECIAL_OFF  = 32                            # special projections start lane
ROW_TILE_MAX = 256                           # row tile cap for the 1-D grid

# parameter-slab row layout (all slice offsets 8-aligned)
P32_ROWS     = EMB + 8        # 40: rows [0:EMB] = W_fold, row EMB = b_fold
B_FUSED_ROW  = HIDDEN         # 32
B_SUP_ROW    = HIDDEN + 8     # 40
P128_ROWS    = HIDDEN + 16    # 48


# ----------------------------- fused Pallas kernel -----------------------------

def _fused_forward_kernel(emb_ref, p32_ref, p128_ref, wsup_ref, outs_ref, main_ref):
    """Whole MultiTaskModel forward for one row tile of CLS embeddings."""
    # folded encoder projection + pooler: pooled = tanh(emb @ (W_enc@W_pool) + b_fold)
    w_fold = p32_ref[0:EMB, :]                      # (EMB, HIDDEN)
    b_fold = p32_ref[EMB:EMB + 1, :]                # (1, HIDDEN)
    pooled = jnp.tanh(jnp.dot(emb_ref[...], w_fold,
                              preferred_element_type=jnp.float32) + b_fold)

    # one lane-dense matmul producing: lanes [0:12] task logits, lanes [32:128]
    # the three 32-wide "special" projections (biases already packed in b_fused).
    w_fused = p128_ref[0:HIDDEN, :]                 # (HIDDEN, 128)
    b_fused = p128_ref[B_FUSED_ROW:B_FUSED_ROW + 1, :]   # (1, 128)
    b_sup   = p128_ref[B_SUP_ROW:B_SUP_ROW + 1, :]       # (1, 128)

    fused = jnp.dot(pooled, w_fused,
                    preferred_element_type=jnp.float32) + b_fused   # (TB, 128)
    outs_ref[...] = fused.astype(outs_ref.dtype)    # lane-dense store

    # supervisor head: relu, then one (TB,128)x(128,128) matmul whose weight
    # rows already carry task_weight[t]/sum(task_weight) (zero rows for the
    # logit/pad lanes), so no slicing / scaling / per-task loop is needed.
    main_ref[...] = (jnp.dot(jnp.maximum(fused, 0.0), wsup_ref[...],
                             preferred_element_type=jnp.float32)
                     + b_sup).astype(main_ref.dtype)


def _row_tile(batch):
    if batch >= ROW_TILE_MAX:
        return ROW_TILE_MAX
    return max(8, ((batch + 7) // 8) * 8)


def _fused_forward_pallas(emb_cls, slab32, slab128, w_sup_rt, tb):
    b_pad = emb_cls.shape[0]
    nb = b_pad // tb
    return pl.pallas_call(
        _fused_forward_kernel,
        grid=(nb,),
        in_specs=[
            pl.BlockSpec((tb, EMB), lambda i: (i, 0)),            # activations: row-tiled
            pl.BlockSpec((P32_ROWS, HIDDEN), lambda i: (0, 0)),   # weights: VMEM-resident
            pl.BlockSpec((P128_ROWS, HEAD_PAD), lambda i: (0, 0)),
            pl.BlockSpec((HEAD_PAD, HEAD_PAD), lambda i: (0, 0)),
        ],
        out_specs=(
            pl.BlockSpec((tb, HEAD_PAD), lambda i: (i, 0)),
            pl.BlockSpec((tb, HEAD_PAD), lambda i: (i, 0)),
        ),
        out_shape=(
            jax.ShapeDtypeStruct((b_pad, HEAD_PAD), jnp.float32),  # task logits (+special lanes)
            jax.ShapeDtypeStruct((b_pad, HEAD_PAD), jnp.float32),  # supervisor logits
        ),
        compiler_params=pltpu.CompilerParams(
            dimension_semantics=("parallel",)),   # v7x: row tiles split across both TCs
    )(emb_cls, slab32, slab128, w_sup_rt)


@jax.jit
def _forward_device(dp, token_ids, segment_ids):
    # TODO(synk): the pretrained BertModel / GPT2 / Bart encoder is replaced by an
    # embedding lookup at the CLS position; mask_ids and non-CLS tokens are unused.
    emb_cls = dp["tok_emb"][token_ids[:, 0]] + dp["seg_emb"][segment_ids[:, 0]]  # (B, EMB)

    # task weights in plain JAX (parameter-only, batch-independent):
    #   e = exp(tw); z = sum(e[1:]); tw = sigmoid(share_rate)*e/z; tw[0] = 1
    e = jnp.exp(dp["task_weight"])
    z = jnp.sum(e[1:])
    sig = 1.0 / (1.0 + jnp.exp(-dp["share_rate"]))
    tw = (sig * e / z).astype(jnp.float32)
    tw = tw.at[0].set(1.0)
    total = jnp.sum(tw)

    # fold tw[t]/sum(tw) into the stacked supervisor weight rows (zero rows for
    # the logit/pad lanes), so the kernel's supervisor path is a single matmul.
    row_scale = jnp.concatenate(
        [jnp.zeros((SPECIAL_OFF,), jnp.float32),
         jnp.repeat(tw / total, SPECIAL_DIM)])                    # (128,)
    w_sup_rt = dp["W_sup_base"] * row_scale[:, None]              # (128, 128)

    batch = emb_cls.shape[0]
    tb = _row_tile(batch)
    b_pad = ((batch + tb - 1) // tb) * tb
    if b_pad != batch:
        emb_cls = jnp.pad(emb_cls, ((0, b_pad - batch), (0, 0)))

    outs_all, main_all = _fused_forward_pallas(
        emb_cls, dp["slab32"], dp["slab128"], w_sup_rt, tb)
    return outs_all[:batch], main_all[:batch], tw


# ----------------------------- parameters -----------------------------

def init_params(key):
    ks = jax.random.split(key, 8)

    def dense(k, fan_in, fan_out):
        return (0.1 * jax.random.normal(k, (fan_in, fan_out))).astype(jnp.float32)

    params = {}
    params["tok_emb"] = (0.1 * jax.random.normal(ks[0], (VOCAB, EMB))).astype(jnp.float32)
    params["seg_emb"] = (0.1 * jax.random.normal(ks[1], (2, EMB))).astype(jnp.float32)
    params["W_enc"]  = dense(ks[2], EMB, HIDDEN);    params["b_enc"]  = jnp.zeros((HIDDEN,), jnp.float32)
    params["W_pool"] = dense(ks[3], HIDDEN, HIDDEN); params["b_pool"] = jnp.zeros((HIDDEN,), jnp.float32)
    params["task_out_W"] = [dense(jax.random.fold_in(ks[4], t), HIDDEN, NUM_CLASSES) for t in range(NUM_TASKS)]
    params["task_out_b"] = [jnp.zeros((NUM_CLASSES,), jnp.float32) for _ in range(NUM_TASKS)]
    params["task_sp_W"]  = [dense(jax.random.fold_in(ks[5], t), HIDDEN, SPECIAL_DIM) for t in range(NUM_TASKS)]
    params["task_sp_b"]  = [jnp.zeros((SPECIAL_DIM,), jnp.float32) for _ in range(NUM_TASKS)]
    params["W_sup"] = dense(ks[6], SPECIAL_DIM, NUM_CLASSES); params["b_sup"] = jnp.zeros((NUM_CLASSES,), jnp.float32)
    # exactly as in __init__: share_rate = log(p/(1-p)), p = 0.01; task_weight = ones(T)
    p_init = 0.01
    params["share_rate"]  = jnp.array([np.log(p_init / (1.0 - p_init))], jnp.float32)
    params["task_weight"] = jnp.ones((NUM_TASKS,), jnp.float32)
    return params


def prepare_dense_params(params):
    """One-time weight folding / fusion / slab packing (4 kernel operands total)."""
    dp = {
        "tok_emb": params["tok_emb"],
        "seg_emb": params["seg_emb"],
        "share_rate": params["share_rate"].astype(jnp.float32),
        "task_weight": params["task_weight"].astype(jnp.float32),
    }

    # --- slab32: folded encoder-projection + pooler  (rows 0:EMB = W_fold, row EMB = b_fold)
    w_fold = params["W_enc"] @ params["W_pool"]                               # (EMB, HIDDEN)
    b_fold = params["b_enc"] @ params["W_pool"] + params["b_pool"]            # (HIDDEN,)
    slab32 = jnp.zeros((P32_ROWS, HIDDEN), jnp.float32)
    slab32 = slab32.at[0:EMB, :].set(w_fold)
    slab32 = slab32.at[EMB, :].set(b_fold)
    dp["slab32"] = slab32

    # --- fused heads + special projections: one (HIDDEN, 128) weight
    #     lanes [0:12] = concat task logits, lanes [32+32t : 32+32(t+1)] = special proj t
    w_fused = jnp.zeros((HIDDEN, HEAD_PAD), jnp.float32)
    b_fused = jnp.zeros((HEAD_PAD,), jnp.float32)
    w_out_cat = jnp.concatenate(params["task_out_W"], axis=1)                 # (HIDDEN, 12)
    b_out_cat = jnp.concatenate(params["task_out_b"])                         # (12,)
    w_fused = w_fused.at[:, 0:OUT_WIDTH].set(w_out_cat)
    b_fused = b_fused.at[0:OUT_WIDTH].set(b_out_cat)
    for t in range(NUM_TASKS):
        lo = SPECIAL_OFF + t * SPECIAL_DIM
        w_fused = w_fused.at[:, lo:lo + SPECIAL_DIM].set(params["task_sp_W"][t])
        b_fused = b_fused.at[lo:lo + SPECIAL_DIM].set(params["task_sp_b"][t])

    b_sup_pad = jnp.zeros((HEAD_PAD,), jnp.float32).at[0:NUM_CLASSES].set(params["b_sup"])

    slab128 = jnp.zeros((P128_ROWS, HEAD_PAD), jnp.float32)
    slab128 = slab128.at[0:HIDDEN, :].set(w_fused)
    slab128 = slab128.at[B_FUSED_ROW, :].set(b_fused)
    slab128 = slab128.at[B_SUP_ROW, :].set(b_sup_pad)
    dp["slab128"] = slab128

    # --- stacked supervisor weight base (task-weight scaling applied per call)
    w_sup_pad = jnp.pad(params["W_sup"], ((0, 0), (0, HEAD_PAD - NUM_CLASSES)))   # (32, 128)
    dp["W_sup_base"] = jnp.concatenate(
        [jnp.zeros((SPECIAL_OFF, HEAD_PAD), jnp.float32),
         jnp.tile(w_sup_pad, (NUM_TASKS, 1))], axis=0)                            # (128, 128)
    return dp


# ----------------------------- forward pass -----------------------------

def multi_task_forward(dense_params, token_ids, segment_ids, mask_ids, task_ids, supervised=True):
    # All device compute is ONE jitted call containing ONE fused pallas_call.
    outs_all, main_all, tw = _forward_device(dense_params, token_ids, segment_ids)

    # One bulk device->host transfer, then pure-numpy routing (torch.eq / nonzero /
    # index_select equivalent) -- no per-task device gathers or transfers.
    outs_np, main_np, tw_np = jax.device_get((outs_all, main_all, tw))
    task_ids_np = np.asarray(task_ids)

    outputs_map = {}
    main_idx = None
    for t in range(NUM_TASKS):
        idx = np.nonzero(task_ids_np == t)[0]
        if idx.shape[0] < 1:
            continue
        # TODO(synk): external per-task sub-models (get_model_base) replaced by linear heads.
        outputs_map[t] = [outs_np[idx, t * NUM_CLASSES:(t + 1) * NUM_CLASSES]]
        if t == MAIN_TASK_ID:
            main_idx = idx

    if supervised and main_idx is not None:
        main_outputs = main_np[main_idx, :NUM_CLASSES]
    else:
        main_outputs = []

    return outputs_map, main_outputs, tw_np, dense_params["share_rate"]


# ----------------------------- plain-JAX reference -----------------------------

def reference_forward(params, token_ids, segment_ids, mask_ids, task_ids, supervised=True):
    emb_cls = params["tok_emb"][token_ids[:, 0]] + params["seg_emb"][segment_ids[:, 0]]
    h0 = emb_cls @ params["W_enc"] + params["b_enc"]
    pooled = jnp.tanh(h0 @ params["W_pool"] + params["b_pool"])

    twe = jnp.exp(params["task_weight"])
    z = jnp.sum(twe[1:])
    tw = (1.0 / (1.0 + jnp.exp(-params["share_rate"]))) * (twe / z)
    tw = tw.at[0].set(1.0)

    task_ids_np = np.asarray(task_ids)
    outputs_map = {}
    main_cls = None
    for t in range(NUM_TASKS):
        idx = np.nonzero(task_ids_np == t)[0]
        if idx.shape[0] < 1:
            continue
        cls_t = pooled[idx]
        outputs_map[t] = [cls_t @ params["task_out_W"][t] + params["task_out_b"][t]]
        if t == MAIN_TASK_ID:
            main_cls = cls_t

    main_outputs = []
    if supervised and main_cls is not None:
        feats = jnp.maximum(main_cls @ params["task_sp_W"][0] + params["task_sp_b"][0], 0.0) * tw[0]
        for t in range(1, NUM_TASKS):
            feats = feats + tw[t] * jnp.maximum(
                main_cls @ params["task_sp_W"][t] + params["task_sp_b"][t], 0.0)
        feats = feats / jnp.sum(tw)
        main_outputs = feats @ params["W_sup"] + params["b_sup"]
    return outputs_map, main_outputs, tw, params["share_rate"]


# ----------------------------- demo -----------------------------

if __name__ == "__main__":
    key = jax.random.PRNGKey(0)
    pkey, dkey = jax.random.split(key)
    params = init_params(pkey)
    dense_params = prepare_dense_params(params)

    B, S = 8, 8
    k1, k2 = jax.random.split(dkey)
    token_ids = jax.random.randint(k1, (B, S), 0, VOCAB, dtype=jnp.int32)
    segment_ids = jax.random.randint(k2, (B, S), 0, 2, dtype=jnp.int32)
    mask_ids = jnp.ones((B, S), jnp.int32)
    task_ids = jnp.array([0, 1, 2, 0, 1, 2, 0, 0], dtype=jnp.int32)   # main task (0) present

    outputs_map, main_outputs, task_weight, share_rate = multi_task_forward(
        dense_params, token_ids, segment_ids, mask_ids, task_ids, supervised=True)
    jax.block_until_ready(main_outputs)
    jax.block_until_ready(task_weight)

    r_map, r_main, r_tw, _ = reference_forward(
        params, token_ids, segment_ids, mask_ids, task_ids, supervised=True)
    np.testing.assert_allclose(np.asarray(task_weight), np.asarray(r_tw), rtol=1e-3, atol=1e-3)
    np.testing.assert_allclose(np.asarray(main_outputs), np.asarray(r_main), rtol=1e-2, atol=1e-2)
    for t in outputs_map:
        np.testing.assert_allclose(np.asarray(outputs_map[t][0]),
                                   np.asarray(r_map[t][0]), rtol=1e-2, atol=1e-2)

    print("KERNEL_OK")
</pallas_src>

<mosaic_0001>
module attributes {stable_mosaic.version = 11 : i64} {
  func.func @_fused_forward_kernel(%arg0: i32, %arg1: memref<8x32xf32, #tpu.memory_space<vmem>>, %arg2: memref<40x32xf32, #tpu.memory_space<vmem>>, %arg3: memref<48x128xf32, #tpu.memory_space<vmem>>, %arg4: memref<128x128xf32, #tpu.memory_space<vmem>>, %arg5: memref<8x128xf32, #tpu.memory_space<vmem>>, %arg6: memref<8x128xf32, #tpu.memory_space<vmem>>) attributes {dimension_semantics = [#tpu.dimension_semantics<parallel>], iteration_bounds = array<i64: 1>, scalar_prefetch = 0 : i64, scratch_operands = 0 : i64, tpu.core_type = #tpu.core_type<tc>, window_params = [{transform_indices = @transform_0, window_bounds = array<i64: 8, 32>}, {pipeline_mode = #tpu.pipeline_mode<synchronous>, transform_indices = @transform_1, window_bounds = array<i64: 40, 32>}, {pipeline_mode = #tpu.pipeline_mode<synchronous>, transform_indices = @transform_2, window_bounds = array<i64: 48, 128>}, {pipeline_mode = #tpu.pipeline_mode<synchronous>, transform_indices = @transform_3, window_bounds = array<i64: 128, 128>}, {transform_indices = @transform_4, window_bounds = array<i64: 8, 128>}, {transform_indices = @transform_5, window_bounds = array<i64: 8, 128>}]} {
    %c0 = arith.constant 0 : index
    %c0_0 = arith.constant 0 : index
    %0 = vector.load %arg2[%c0, %c0_0] : memref<40x32xf32, #tpu.memory_space<vmem>>, vector<32x32xf32>
    %c32 = arith.constant 32 : index
    %c0_1 = arith.constant 0 : index
    %1 = vector.load %arg2[%c32, %c0_1] : memref<40x32xf32, #tpu.memory_space<vmem>>, vector<1x32xf32>
    %c0_2 = arith.constant 0 : index
    %c0_3 = arith.constant 0 : index
    %2 = vector.load %arg1[%c0_2, %c0_3] : memref<8x32xf32, #tpu.memory_space<vmem>>, vector<8x32xf32>
    %cst = arith.constant dense<0.000000e+00> : vector<8x32xf32>
    %3 = tpu.matmul %2, %0, %cst {dimension_numbers = #tpu.dot_dimension_numbers<[1], [0], [0], [1], [0, 0, 1, 1], [], []>} : vector<8x32xf32>, vector<32x32xf32>, vector<8x32xf32> -> vector<8x32xf32>
    %4 = vector.broadcast %1 : vector<1x32xf32> to vector<8x32xf32>
    %5 = arith.addf %3, %4 : vector<8x32xf32>
    %6 = math.tanh %5 : vector<8x32xf32>
    %c0_4 = arith.constant 0 : index
    %c0_5 = arith.constant 0 : index
    %7 = vector.load %arg3[%c0_4, %c0_5] : memref<48x128xf32, #tpu.memory_space<vmem>>, vector<32x128xf32>
    %c32_6 = arith.constant 32 : index
    %c0_7 = arith.constant 0 : index
    %8 = vector.load %arg3[%c32_6, %c0_7] : memref<48x128xf32, #tpu.memory_space<vmem>>, vector<1x128xf32>
    %c40 = arith.constant 40 : index
    %c0_8 = arith.constant 0 : index
    %9 = vector.load %arg3[%c40, %c0_8] : memref<48x128xf32, #tpu.memory_space<vmem>>, vector<1x128xf32>
    %cst_9 = arith.constant dense<0.000000e+00> : vector<8x128xf32>
    %10 = tpu.matmul %6, %7, %cst_9 {dimension_numbers = #tpu.dot_dimension_numbers<[1], [0], [0], [1], [0, 0, 1, 1], [], []>} : vector<8x32xf32>, vector<32x128xf32>, vector<8x128xf32> -> vector<8x128xf32>
    %11 = vector.broadcast %8 : vector<1x128xf32> to vector<8x128xf32>
    %12 = arith.addf %10, %11 : vector<8x128xf32>
    %c0_10 = arith.constant 0 : index
    %c0_11 = arith.constant 0 : index
    %13 = vector.load %arg5[%c0_10, %c0_11] : memref<8x128xf32, #tpu.memory_space<vmem>>, vector<8x128xf32>
    tpu.vector_store %arg5[%c0_10, %c0_11], %12 {strides = array<i32>} : memref<8x128xf32, #tpu.memory_space<vmem>>, vector<8x128xf32>,
    %cst_12 = arith.constant 0.000000e+00 : f32
    %14 = vector.broadcast %cst_12 : f32 to vector<8x128xf32>
    %15 = arith.maximumf %12, %14 : vector<8x128xf32>
    %c0_13 = arith.constant 0 : index
    %c0_14 = arith.constant 0 : index
    %16 = vector.load %arg4[%c0_13, %c0_14] : memref<128x128xf32, #tpu.memory_space<vmem>>, vector<128x128xf32>
    %cst_15 = arith.constant dense<0.000000e+00> : vector<8x128xf32>
    %17 = tpu.matmul %15, %16, %cst_15 {dimension_numbers = #tpu.dot_dimension_numbers<[1], [0], [0], [1], [0, 0, 1, 1], [], []>} : vector<8x128xf32>, vector<128x128xf32>, vector<8x128xf32> -> vector<8x128xf32>
    %18 = vector.broadcast %9 : vector<1x128xf32> to vector<8x128xf32>
    %19 = arith.addf %17, %18 : vector<8x128xf32>
    %c0_16 = arith.constant 0 : index
    %c0_17 = arith.constant 0 : index
    %20 = vector.load %arg6[%c0_16, %c0_17] : memref<8x128xf32, #tpu.memory_space<vmem>>, vector<8x128xf32>
    tpu.vector_store %arg6[%c0_16, %c0_17], %19 {strides = array<i32>} : memref<8x128xf32, #tpu.memory_space<vmem>>, vector<8x128xf32>,
    return
  }
  func.func @transform_0(%arg0: i32) -> (i32, i32) {
    %c0_i32 = arith.constant 0 : i32
    %c0_i32_0 = arith.constant 0 : i32
    return %arg0, %c0_i32 : i32, i32
  }
  func.func @transform_1(%arg0: i32) -> (i32, i32) {
    %c0_i32 = arith.constant 0 : i32
    %c0_i32_0 = arith.constant 0 : i32
    %c0_i32_1 = arith.constant 0 : i32
    return %c0_i32, %c0_i32_0 : i32, i32
  }
  func.func @transform_2(%arg0: i32) -> (i32, i32) {
    %c0_i32 = arith.constant 0 : i32
    %c0_i32_0 = arith.constant 0 : i32
    %c0_i32_1 = arith.constant 0 : i32
    return %c0_i32, %c0_i32_0 : i32, i32
  }
  func.func @transform_3(%arg0: i32) -> (i32, i32) {
    %c0_i32 = arith.constant 0 : i32
    %c0_i32_0 = arith.constant 0 : i32
    %c0_i32_1 = arith.constant 0 : i32
    return %c0_i32, %c0_i32_0 : i32, i32
  }
  func.func @transform_4(%arg0: i32) -> (i32, i32) {
    %c0_i32 = arith.constant 0 : i32
    %c0_i32_0 = arith.constant 0 : i32
    return %arg0, %c0_i32 : i32, i32
  }
  func.func @transform_5(%arg0: i32) -> (i32, i32) {
    %c0_i32 = arith.constant 0 : i32
    %c0_i32_0 = arith.constant 0 : i32
    return %arg0, %c0_i32 : i32, i32
  }
}

</mosaic_0001>

<llo_original>
// kernel: _forward_device.1
$region0: #{_forward_device.1}
  #allocation0 [shape = 'u32[]', space=smem, size = 0x4, offset = 0x4, fixed_abs, tag = 'smem constant byte address 0x4 - core index']
  #allocation1 [shape = 'u32[144,128]{1,0:T(1,128)}', space=vmem, size = 0x12000, scoped, tag = 'internal scratch']
  %s0 = inlined_call_operand.vmem [shape: f32[8,32], index: 0, kind: input, shape index: {}]
  %s1 = inlined_call_operand.vmem [shape: f32[40,32], index: 1, kind: input, shape index: {}]
  %s2 = inlined_call_operand.vmem [shape: f32[48,128], index: 2, kind: input, shape index: {}]
  %s3 = inlined_call_operand.vmem [shape: f32[128,128], index: 3, kind: input, shape index: {}]
  %s4 = inlined_call_operand.hbm [shape: f32[8,128], index: 4, kind: output, shape index: {0}]
  %s5 = inlined_call_operand.hbm [shape: f32[8,128], index: 5, kind: output, shape index: {1}]
  %6 = xla_tuple %s4, %s5
  %s7 = sld [smem:[#allocation0]]
  $region34: #{_forward_device.1} parent=0
    _
  %s9 = ssub.s32 1, %s7
  %s10 = scalar_select 0, %s9, %s7
  $region1: #{_forward_device.1} parent=0
    #allocation2 [shape = 'u8[4096]{0}', space=vmem, size = 0x1000, scoped, tag = 'output window, operand 0, single buffered']
    #allocation3 [shape = 's32[1]{0}', space=sflag, size = 0x4, scoped, tag = 'scoped memory for _forward_device.1']
    #allocation4 [shape = 'u8[4096]{0}', space=vmem, size = 0x1000, scoped, tag = 'output window, operand 1, single buffered']
    #allocation5 [shape = 's32[1]{0}', space=sflag, size = 0x4, scoped, tag = 'scoped memory for _forward_device.1']
    %11 = vsyncpa [#allocation3], 0
    %12 = vsyncpa [#allocation5], 0
    // Predicated region
    $region2: #{_forward_device.1} parent=1 // pred_check
      _
    $region3: #{_forward_device.1} parent=1 // pred_check_branch
      %14 = sbr.rel (0) target = $region5
    $region4: #{_forward_device.1} parent=1 // pred_region
      _
    $region5: #{_forward_device.1} parent=1 // pred_fallthru
      _
    // Predicated region
    $region6: #{_forward_device.1} parent=1 // pred_check
      _
    $region7: #{_forward_device.1} parent=1 // pred_check_branch
      %16 = sbr.rel (0) target = $region9
    $region8: #{_forward_device.1} parent=1 // pred_region
      _
    $region9: #{_forward_device.1} parent=1 // pred_fallthru
      _
    // Predicated region
    $region10: #{_forward_device.1} parent=1 // pred_check
      _
    $region11: #{_forward_device.1} parent=1 // pred_check_branch
      %18 = sbr.rel (0) target = $region13
    $region12: #{_forward_device.1} parent=1 // pred_region
      _
    $region13: #{_forward_device.1} parent=1 // pred_fallthru
      _
    // Predicated region
    $region14: #{_forward_device.1} parent=1 // pred_check
      _
    $region15: #{_forward_device.1} parent=1 // pred_check_branch
      %20 = sbr.rel (0) target = $region17
    $region16: #{_forward_device.1} parent=1 // pred_region
      _
    $region17: #{_forward_device.1} parent=1 // pred_fallthru
      _
    %v21 = vld [vmem:[%s1] sm:$0xff]
    %v22 = vld [vmem:[%s1 + $0x8] sm:$0xff]
    %v23 = vld [vmem:[%s1 + $0x10] sm:$0xff]
    %v24 = vld [vmem:[%s1 + $0x18] sm:$0xff]
    %v25 = vld [vmem:[%s1 + $0x20] sm:$0x1]
    %v26 = vld [vmem:[%s0] sm:$0xff]
    %v27 = vlaneseq
    %v28 = vshrl.u32 %v27, 7
    %v29 = vsub.s32 0, %v28
    %v30 = vrot.slane %v25, %v29
    %vm31 = vcmask 261120
    %v33 = vsel %vm31, %v26, 0
    %35 = vmatprep.subr.mxu0 0.0
    %36 = vmatpush1.msra.mxu0 %v21
    %37 = vmatprep.subr.mxu0 0.0
    %38 = vmatpush1.msra.mxu0 %v22
    %39 = vmatprep.subr.mxu0 0.0
    %40 = vmatpush1.msra.mxu0 %v23
    %41 = vmatprep.subr.mxu0 0.0
    %42 = vmatpush1.msra.mxu0 %v24
    %43 = vmatprep.subr.mxu0 0.0
    %44 = vmatpush1.msra.mxu0 0.0
    %45 = vmatprep.subr.mxu0 0.0
    %46 = vmatpush1.msra.mxu0 0.0
    %47 = vmatprep.subr.mxu0 0.0
    %48 = vmatpush1.msra.mxu0 0.0
    %49 = vmatprep.subr.mxu0 0.0
    %50 = vmatpush1.msra.mxu0 0.0
    %51 = vmatprep.subr.mxu0 0.0
    %52 = vmatpush1.msra.mxu0 0.0
    %53 = vmatprep.subr.mxu0 0.0
    %54 = vmatpush1.msra.mxu0 0.0
    %55 = vmatprep.subr.mxu0 0.0
    %56 = vmatpush1.msra.mxu0 0.0
    %57 = vmatprep.subr.mxu0 0.0
    %58 = vmatpush1.msra.mxu0 0.0
    %59 = vmatprep.subr.mxu0 0.0
    %60 = vmatpush1.msra.mxu0 0.0
    %61 = vmatprep.subr.mxu0 0.0
    %62 = vmatpush1.msra.mxu0 0.0
    %63 = vmatprep.subr.mxu0 0.0
    %64 = vmatpush1.msra.mxu0 0.0
    %65 = vmatprep.subr.mxu0 0.0
    %66 = vmatpush1.msra.mxu0 0.0
    %67 = vmatprep.subr.mxu0 0.0
    %68 = vmatpush1.msra.mxu0 0.0
    %69 = vmatprep.subr.mxu0 0.0
    %70 = vmatpush1.msra.mxu0 0.0
    %71 = vmatprep.subr.mxu0 0.0
    %72 = vmatpush1.msra.mxu0 0.0
    %73 = vmatprep.subr.mxu0 0.0
    %74 = vmatpush1.msra.mxu0 0.0
    %75 = vmatprep.subr.mxu0 0.0
    %76 = vmatpush1.msra.mxu0 0.0
    %77 = vmatprep.subr.mxu0 0.0
    %78 = vmatpush1.msra.mxu0 0.0
    %79 = vmatprep.subr.mxu0 0.0
    %80 = vmatpush1.msra.mxu0 0.0
    %81 = vmatprep.subr.mxu0 0.0
    %82 = vmatpush1.msra.mxu0 0.0
    %83 = vmatprep.subr.mxu0 0.0
    %84 = vmatpush1.msra.mxu0 0.0
    %85 = vmatprep.subr.mxu0 0.0
    %86 = vmatpush1.msra.mxu0 0.0
    %87 = vmatprep.subr.mxu0 0.0
    %88 = vmatpush1.msra.mxu0 0.0
    %89 = vmatprep.subr.mxu0 0.0
    %90 = vmatpush1.msra.mxu0 0.0
    %91 = vmatprep.subr.mxu0 0.0
    %92 = vmatpush1.msra.mxu0 0.0
    %93 = vmatprep.subr.mxu0 0.0
    %94 = vmatpush1.msra.mxu0 0.0
    %95 = vmatprep.subr.mxu0 0.0
    %96 = vmatpush1.msra.mxu0 0.0
    %97 = vmatprep.subr.mxu0 0.0
    %98 = vmatpush1.msra.mxu0 0.0
    %99 = vmatprep.mubr.f32.mxu0 0.0
    %100 = vmatmul.mubr.f32.gmra.mrb[0].mxu0 %v33
    %v101 = vpop.f32.mrb[0].mxu0
    %v102 = vadd.f32 %v30, %v101
    %v103 = vpop.f32.mrb[0].mxu0
    %104 = vdwg.mxu0
    %v105 = vtanh.pop %v102
    %v106 = vld [vmem:[%s2] sm:$0xff]
    %v107 = vld [vmem:[%s2 + $0x8] sm:$0xff]
    %v108 = vld [vmem:[%s2 + $0x10] sm:$0xff]
    %v109 = vld [vmem:[%s2 + $0x18] sm:$0xff]
    %v110 = vld [vmem:[%s2 + $0x20] sm:$0x1]
    %v111 = vld [vmem:[%s2 + $0x28] sm:$0x1]
    %v112 = vlaneseq
    %v113 = vshrl.u32 %v112, 7
    %v114 = vsub.s32 0, %v113
    %v115 = vrot.slane %v110, %v114
    %v117 = vsel %vm31, %v105, 0
    %119 = vmatprep.subr.mxu0 0.0
    %120 = vmatpush1.msra.mxu0 %v106
    %121 = vmatprep.subr.mxu0 0.0
    %122 = vmatpush1.msra.mxu0 %v107
    %123 = vmatprep.subr.mxu0 0.0
    %124 = vmatpush1.msra.mxu0 %v108
    %125 = vmatprep.subr.mxu0 0.0
    %126 = vmatpush1.msra.mxu0 %v109
    %127 = vmatprep.subr.mxu0 0.0
    %128 = vmatpush1.msra.mxu0 0.0
    %129 = vmatprep.subr.mxu0 0.0
    %130 = vmatpush1.msra.mxu0 0.0
    %131 = vmatprep.subr.mxu0 0.0
    %132 = vmatpush1.msra.mxu0 0.0
    %133 = vmatprep.subr.mxu0 0.0
    %134 = vmatpush1.msra.mxu0 0.0
    %135 = vmatprep.subr.mxu0 0.0
    %136 = vmatpush1.msra.mxu0 0.0
    %137 = vmatprep.subr.mxu0 0.0
    %138 = vmatpush1.msra.mxu0 0.0
    %139 = vmatprep.subr.mxu0 0.0
    %140 = vmatpush1.msra.mxu0 0.0
    %141 = vmatprep.subr.mxu0 0.0
    %142 = vmatpush1.msra.mxu0 0.0
    %143 = vmatprep.subr.mxu0 0.0
    %144 = vmatpush1.msra.mxu0 0.0
    %145 = vmatprep.subr.mxu0 0.0
    %146 = vmatpush1.msra.mxu0 0.0
    %147 = vmatprep.subr.mxu0 0.0
    %148 = vmatpush1.msra.mxu0 0.0
    %149 = vmatprep.subr.mxu0 0.0
    %150 = vmatpush1.msra.mxu0 0.0
    %151 = vmatprep.subr.mxu0 0.0
    %152 = vmatpush1.msra.mxu0 0.0
    %153 = vmatprep.subr.mxu0 0.0
    %154 = vmatpush1.msra.mxu0 0.0
    %155 = vmatprep.subr.mxu0 0.0
    %156 = vmatpush1.msra.mxu0 0.0
    %157 = vmatprep.subr.mxu0 0.0
    %158 = vmatpush1.msra.mxu0 0.0
    %159 = vmatprep.subr.mxu0 0.0
    %160 = vmatpush1.msra.mxu0 0.0
    %161 = vmatprep.subr.mxu0 0.0
    %162 = vmatpush1.msra.mxu0 0.0
    %163 = vmatprep.subr.mxu0 0.0
    %164 = vmatpush1.msra.mxu0 0.0
    %165 = vmatprep.subr.mxu0 0.0
    %166 = vmatpush1.msra.mxu0 0.0
    %167 = vmatprep.subr.mxu0 0.0
    %168 = vmatpush1.msra.mxu0 0.0
    %169 = vmatprep.subr.mxu0 0.0
    %170 = vmatpush1.msra.mxu0 0.0
    %171 = vmatprep.subr.mxu0 0.0
    %172 = vmatpush1.msra.mxu0 0.0
    %173 = vmatprep.subr.mxu0 0.0
    %174 = vmatpush1.msra.mxu0 0.0
    %175 = vmatprep.subr.mxu0 0.0
    %176 = vmatpush1.msra.mxu0 0.0
    %177 = vmatprep.subr.mxu0 0.0
    %178 = vmatpush1.msra.mxu0 0.0
    %179 = vmatprep.subr.mxu0 0.0
    %180 = vmatpush1.msra.mxu0 0.0
    %181 = vmatprep.subr.mxu0 0.0
    %182 = vmatpush1.msra.mxu0 0.0
    %183 = vmatprep.mubr.f32.mxu0 0.0
    %184 = vmatmul.mubr.f32.gmra.mrb[0].mxu0 %v117
    %v185 = vpop.f32.mrb[0].mxu0
    %v186 = vadd.f32 %v115, %v185
    %v187 = vpop.f32.mrb[0].mxu0
    %188 = vdwg.mxu0
    %189 = vst [vmem:[#allocation2] sm:$0xff] %v186
    %v190 = vmax.f32 %v186, 0.0
    %v191 = vld [vmem:[%s3] sm:$0xff]
    %v192 = vld [vmem:[%s3 + $0x8] sm:$0xff]
    %v193 = vld [vmem:[%s3 + $0x10] sm:$0xff]
    %v194 = vld [vmem:[%s3 + $0x18] sm:$0xff]
    %v195 = vld [vmem:[%s3 + $0x20] sm:$0xff]
    %v196 = vld [vmem:[%s3 + $0x28] sm:$0xff]
    %v197 = vld [vmem:[%s3 + $0x30] sm:$0xff]
    %v198 = vld [vmem:[%s3 + $0x38] sm:$0xff]
    %v199 = vld [vmem:[%s3 + $0x40] sm:$0xff]
    %v200 = vld [vmem:[%s3 + $0x48] sm:$0xff]
    %v201 = vld [vmem:[%s3 + $0x50] sm:$0xff]
    %v202 = vld [vmem:[%s3 + $0x58] sm:$0xff]
    %v203 = vld [vmem:[%s3 + $0x60] sm:$0xff]
    %v204 = vld [vmem:[%s3 + $0x68] sm:$0xff]
    %v205 = vld [vmem:[%s3 + $0x70] sm:$0xff]
    %v206 = vld [vmem:[%s3 + $0x78] sm:$0xff]
    %v207 = vlaneseq
    %v208 = vshrl.u32 %v207, 7
    %v209 = vsub.s32 0, %v208
    %v210 = vrot.slane %v111, %v209
    %211 = vmatprep.subr.mxu0 0.0
    %212 = vmatpush1.msra.mxu0 %v191
    %213 = vmatprep.subr.mxu0 0.0
    %214 = vmatpush1.msra.mxu0 %v192
    %215 = vmatprep.subr.mxu0 0.0
    %216 = vmatpush1.msra.mxu0 %v193
    %217 = vmatprep.subr.mxu0 0.0
    %218 = vmatpush1.msra.mxu0 %v194
    %219 = vmatprep.subr.mxu0 0.0
    %220 = vmatpush1.msra.mxu0 %v195
    %221 = vmatprep.subr.mxu0 0.0
    %222 = vmatpush1.msra.mxu0 %v196
    %223 = vmatprep.subr.mxu0 0.0
    %224 = vmatpush1.msra.mxu0 %v197
    %225 = vmatprep.subr.mxu0 0.0
    %226 = vmatpush1.msra.mxu0 %v198
    %227 = vmatprep.subr.mxu0 0.0
    %228 = vmatpush1.msra.mxu0 %v199
    %229 = vmatprep.subr.mxu0 0.0
    %230 = vmatpush1.msra.mxu0 %v200
    %231 = vmatprep.subr.mxu0 0.0
    %232 = vmatpush1.msra.mxu0 %v201
    %233 = vmatprep.subr.mxu0 0.0
    %234 = vmatpush1.msra.mxu0 %v202
    %235 = vmatprep.subr.mxu0 0.0
    %236 = vmatpush1.msra.mxu0 %v203
    %237 = vmatprep.subr.mxu0 0.0
    %238 = vmatpush1.msra.mxu0 %v204
    %239 = vmatprep.subr.mxu0 0.0
    %240 = vmatpush1.msra.mxu0 %v205
    %241 = vmatprep.subr.mxu0 0.0
    %242 = vmatpush1.msra.mxu0 %v206
    %243 = vmatprep.subr.mxu0 0.0
    %244 = vmatpush1.msra.mxu0 0.0
    %245 = vmatprep.subr.mxu0 0.0
    %246 = vmatpush1.msra.mxu0 0.0
    %247 = vmatprep.subr.mxu0 0.0
    %248 = vmatpush1.msra.mxu0 0.0
    %249 = vmatprep.subr.mxu0 0.0
    %250 = vmatpush1.msra.mxu0 0.0
    %251 = vmatprep.subr.mxu0 0.0
    %252 = vmatpush1.msra.mxu0 0.0
    %253 = vmatprep.subr.mxu0 0.0
    %254 = vmatpush1.msra.mxu0 0.0
    %255 = vmatprep.subr.mxu0 0.0
    %256 = vmatpush1.msra.mxu0 0.0
    %257 = vmatprep.subr.mxu0 0.0
    %258 = vmatpush1.msra.mxu0 0.0
    %259 = vmatprep.subr.mxu0 0.0
    %260 = vmatpush1.msra.mxu0 0.0
    %261 = vmatprep.subr.mxu0 0.0
    %262 = vmatpush1.msra.mxu0 0.0
    %263 = vmatprep.subr.mxu0 0.0
    %264 = vmatpush1.msra.mxu0 0.0
    %265 = vmatprep.subr.mxu0 0.0
    %266 = vmatpush1.msra.mxu0 0.0
    %267 = vmatprep.subr.mxu0 0.0
    %268 = vmatpush1.msra.mxu0 0.0
    %269 = vmatprep.subr.mxu0 0.0
    %270 = vmatpush1.msra.mxu0 0.0
    %271 = vmatprep.subr.mxu0 0.0
    %272 = vmatpush1.msra.mxu0 0.0
    %273 = vmatprep.subr.mxu0 0.0
    %274 = vmatpush1.msra.mxu0 0.0
    %275 = vmatprep.mubr.f32.mxu0 0.0
    %276 = vmatmul.mubr.f32.gmra.mrb[0].mxu0 %v190
    %v277 = vpop.f32.mrb[0].mxu0
    %v278 = vadd.f32 %v210, %v277
    %v279 = vpop.f32.mrb[0].mxu0
    %280 = vdwg.mxu0
    %281 = vst [vmem:[#allocation4] sm:$0xff] %v278
    // Predicated region
    $region18: #{_forward_device.1} parent=1 // pred_check
      _
    $region19: #{_forward_device.1} parent=1 // pred_check_branch
      %283 = sbr.rel (0) target = $region21
    $region20: #{_forward_device.1} parent=1 // pred_region
      %s285 = ssub.s32 128, 128
      %286 = vsyncadd [#allocation3], %s285
      %s288 = sshll.u32 [#allocation2], 4
      %s289 = int_to_ptr.vmem [resolvable:$true] %s288
      %291 = dma.vmem_to_hbm [thread:$0]  %s289, 128, %s4, [#allocation3]
    $region21: #{_forward_device.1} parent=1 // pred_fallthru
      _
    // Predicated region
    $region22: #{_forward_device.1} parent=1 // pred_check
      _
    $region23: #{_forward_device.1} parent=1 // pred_check_branch
      %293 = sbr.rel (0) target = $region25
    $region24: #{_forward_device.1} parent=1 // pred_region
      %s295 = ssub.s32 128, 128
      %296 = vsyncadd [#allocation5], %s295
      %s298 = sshll.u32 [#allocation4], 4
      %s299 = int_to_ptr.vmem [resolvable:$true] %s298
      %301 = dma.vmem_to_hbm [thread:$0]  %s299, 128, %s5, [#allocation5]
    $region25: #{_forward_device.1} parent=1 // pred_fallthru
      _
    // Predicated region
    $region26: #{_forward_device.1} parent=1 // pred_check
      _
    $region27: #{_forward_device.1} parent=1 // pred_check_branch
      %303 = sbr.rel (0) target = $region29
    $region28: #{_forward_device.1} parent=1 // pred_region
      %304 = dma.done [#allocation3], 128
    $region29: #{_forward_device.1} parent=1 // pred_fallthru
      _
    // Predicated region
    $region30: #{_forward_device.1} parent=1 // pred_check
      _
    $region31: #{_forward_device.1} parent=1 // pred_check_branch
      %306 = sbr.rel (0) target = $region33
    $region32: #{_forward_device.1} parent=1 // pred_region
      %307 = dma.done [#allocation5], 128
    $region33: #{_forward_device.1} parent=1 // pred_fallthru
      _
    %308 = vsyncpa [#allocation3], 1
    %309 = vsyncpa [#allocation5], 1

</llo_original>
